<compile_context>
chip_gen: v7x
topology: tpu7x:2x2x1
jax: 0.10.0
libtpu: 0.0.40
codegen_flags: <defaults>
</compile_context>

<pallas_src>
import jax
import jax.numpy as jnp
from jax import lax
from jax.experimental import pallas as pl
from jax.experimental.pallas import tpu as pltpu

LANE = 128
_PY_UNROLL_MAX = 16          # python-unroll up to this many chunks, fori_loop beyond
_LEAKY_SLOPE = 0.3


def _make_kernel(s_actual, s_tile, num_s, leaky_slope=_LEAKY_SLOPE):
    n_sub = s_tile // LANE
    s_pad = num_s * s_tile
    has_pad = s_pad != s_actual
    inv_s = 1.0 / float(s_actual)

    # Static layout of the *last* spatial block (the only one that can contain
    # padding): fully-valid chunks, one partial boundary chunk, padded rest.
    last_base = (num_s - 1) * s_tile
    valid_in_last = s_actual - last_base
    n_full_last = valid_in_last // LANE
    rem_last = valid_in_last % LANE

    def kernel(x_ref, w1t_ref, w2t_ref, out_ref, sum_acc, max_acc):
        s_idx = pl.program_id(1)
        last = pl.num_programs(1) - 1

        @pl.when(s_idx == 0)
        def _init():
            sum_acc[...] = jnp.zeros_like(sum_acc)
            max_acc[...] = jnp.full_like(max_acc, -jnp.inf)

        def accumulate(n_chunks):
            """Running (sum, max) over n_chunks unmasked 128-lane chunks.

            Loads + upcasts per chunk (never materializes the whole tile in
            f32); pure VPU add/max.  Cross-lane reduce only at finalize."""
            part_sum = sum_acc[...]
            part_max = max_acc[...]
            if n_chunks <= _PY_UNROLL_MAX:
                for k in range(n_chunks):
                    c = x_ref[:, :, k * LANE:(k + 1) * LANE].astype(jnp.float32)
                    part_sum = part_sum + c
                    part_max = jnp.maximum(part_max, c)
            else:
                def body(k, carry):
                    ps, pm = carry
                    start = pl.multiple_of(k * LANE, LANE)
                    c = x_ref[:, :, pl.ds(start, LANE)].astype(jnp.float32)
                    return ps + c, jnp.maximum(pm, c)
                part_sum, part_max = lax.fori_loop(
                    0, n_chunks, body, (part_sum, part_max))
            return part_sum, part_max

        def store(ps, pm):
            sum_acc[...] = ps
            max_acc[...] = pm

        if not has_pad:
            # No padding anywhere: a single unmasked path for every grid step.
            store(*accumulate(n_sub))
        else:
            if num_s > 1:
                @pl.when(s_idx < last)
                def _steady():                     # fast path: no masking
                    store(*accumulate(n_sub))

            @pl.when(s_idx == last)
            def _tail():
                # Only the boundary chunk pays a (static) mask; fully-padded
                # chunks are skipped statically.  Zero padding keeps the sum
                # exact without any masking.
                ps, pm = accumulate(n_full_last)
                if rem_last:
                    k = n_full_last
                    c = x_ref[:, :, k * LANE:(k + 1) * LANE].astype(jnp.float32)
                    ps = ps + c
                    lane = lax.broadcasted_iota(jnp.int32, c.shape, 2)
                    pm = jnp.maximum(pm, jnp.where(lane < rem_last, c, -jnp.inf))
                store(ps, pm)

        @pl.when(s_idx == last)
        def _finalize():
            bt = out_ref.shape[0]
            # Single cross-lane (XLU) reduce of the lane-partial accumulators.
            avg = jnp.sum(sum_acc[...], axis=-1) * inv_s        # (Bt, C)
            mx = jnp.max(max_acc[...], axis=-1)                 # (Bt, C)
            # Both 1x1-conv FC paths fused into one MXU pass over stacked rows.
            v = jnp.concatenate([avg, mx], axis=0)              # (2*Bt, C)
            h = jnp.dot(v, w1t_ref[...], preferred_element_type=jnp.float32)
            h = jnp.where(h > 0, h, leaky_slope * h)            # LeakyReLU(0.3)
            y = jnp.dot(h, w2t_ref[...], preferred_element_type=jnp.float32)
            out = jax.nn.sigmoid(y[:bt, :] + y[bt:, :])         # (Bt, C)
            out_ref[...] = out[:, None, :].astype(out_ref.dtype)

    return kernel


def _pick_b_tile(B, C, budget_bytes):
    divisors = [d for d in range(1, min(B, 8) + 1) if B % d == 0]
    # Prefer >=2 batch blocks so the "parallel" axis feeds both v7x TensorCores.
    pref = [d for d in divisors if B // d >= 2] or divisors
    b = max(pref)
    # Keep the two f32 lane-partial accumulators within ~1/3 of the budget.
    while b > 1 and 2 * b * C * LANE * 4 > budget_bytes // 3:
        smaller = [d for d in pref if d < b]
        if not smaller:
            break
        b = max(smaller)
    return b


def channel_attention(x_nchw, w1, w2, *, s_tile_max=8192,
                      vmem_budget_bytes=36 * 1024 * 1024,
                      vmem_limit_bytes=48 * 1024 * 1024):
    """x_nchw: (B, C, H, W); w1: (Cr, C, 1, 1); w2: (C, Cr, 1, 1) -> (B, C, 1, 1)."""
    B, C, H, W = x_nchw.shape
    S = H * W
    Cr = w1.shape[0]

    # Keep the input dtype on the wire (bf16 stays bf16); upcast per chunk
    # inside the kernel.
    x = x_nchw.reshape(B, C, S)
    itemsize = x.dtype.itemsize

    b_tile = _pick_b_tile(B, C, vmem_budget_bytes)

    # Accumulator-aware VMEM budget: double-buffered input block + 2 f32
    # accumulators + weight buffers must fit under vmem_limit_bytes with
    # headroom on every chip generation (v7x: 64 MiB physical VMEM).
    acc_bytes = 2 * b_tile * C * LANE * 4
    weight_bytes = 2 * 2 * C * Cr * 4
    avail = max(vmem_budget_bytes - acc_bytes - weight_bytes,
                2 * b_tile * C * LANE * itemsize)
    max_lanes = max(LANE, avail // (2 * b_tile * C * itemsize))
    s_tile = min((max_lanes // LANE) * LANE, s_tile_max,
                 pl.cdiv(S, LANE) * LANE)
    s_tile = max(s_tile, LANE)
    s_pad = pl.cdiv(S, s_tile) * s_tile
    if s_pad != S:
        x = jnp.pad(x, ((0, 0), (0, 0), (0, s_pad - S)))   # zeros: sum-neutral
    num_s = s_pad // s_tile

    # Pre-transpose weights in the wrapper -> no in-kernel transposes.
    w1t = w1.reshape(Cr, C).T.astype(jnp.float32)          # (C, Cr)
    w2t = w2.reshape(C, Cr).T.astype(jnp.float32)          # (Cr, C)

    kernel = _make_kernel(S, s_tile, num_s)

    cost = pl.CostEstimate(
        flops=3 * B * C * S + 8 * B * C * Cr,
        transcendentals=B * C,
        bytes_accessed=B * C * s_pad * itemsize + (2 * C * Cr + B * C) * 4,
    )

    out = pl.pallas_call(
        kernel,
        out_shape=jax.ShapeDtypeStruct((B, 1, C), jnp.float32),
        grid_spec=pltpu.PrefetchScalarGridSpec(
            num_scalar_prefetch=0,
            grid=(B // b_tile, num_s),
            in_specs=[
                pl.BlockSpec((b_tile, C, s_tile), lambda b, s: (b, 0, s)),
                pl.BlockSpec((C, Cr), lambda b, s: (0, 0)),
                pl.BlockSpec((Cr, C), lambda b, s: (0, 0)),
            ],
            out_specs=pl.BlockSpec((b_tile, 1, C), lambda b, s: (b, 0, 0)),
            scratch_shapes=[
                pltpu.VMEM((b_tile, C, LANE), jnp.float32),   # running sum
                pltpu.VMEM((b_tile, C, LANE), jnp.float32),   # running max
            ],
        ),
        compiler_params=pltpu.CompilerParams(
            dimension_semantics=("parallel", "arbitrary"),
            vmem_limit_bytes=vmem_limit_bytes),
        cost_estimate=cost,
    )(x, w1t, w2t)
    return out.reshape(B, C, 1, 1)


def _reference(x_nchw, w1, w2):
    B, C, H, W = x_nchw.shape
    w1_2d = w1.reshape(w1.shape[0], w1.shape[1])
    w2_2d = w2.reshape(w2.shape[0], w2.shape[1])
    xf = x_nchw.astype(jnp.float32)
    avg = jnp.mean(xf, axis=(2, 3))
    mx = jnp.max(xf, axis=(2, 3))

    def fc(v):
        h = v @ w1_2d.T
        h = jnp.where(h > 0, h, _LEAKY_SLOPE * h)
        return h @ w2_2d.T

    return jax.nn.sigmoid(fc(avg) + fc(mx)).reshape(B, C, 1, 1)


def _run_case(key, B, C, H, W, ratio, **kwargs):
    Cr = max(C // ratio, 1)
    k_x, k_w1, k_w2 = jax.random.split(key, 3)
    x = jax.random.normal(k_x, (B, C, H, W), dtype=jnp.float32)
    w1 = jax.random.normal(k_w1, (Cr, C, 1, 1), dtype=jnp.float32) * 0.1
    w2 = jax.random.normal(k_w2, (C, Cr, 1, 1), dtype=jnp.float32) * 0.1
    out = jax.block_until_ready(channel_attention(x, w1, w2, **kwargs))
    ref = _reference(x, w1, w2)
    assert out.shape == (B, C, 1, 1)
    assert jnp.allclose(out, ref, atol=1e-5, rtol=1e-5)


if __name__ == "__main__":
    key = jax.random.PRNGKey(0)
    k1, k2, k3 = jax.random.split(key, 3)

    # Main case (matches the module's intended small shape): no padding,
    # single spatial step, 2 parallel batch blocks.
    _run_case(k1, B=2, C=32, H=16, W=16, ratio=4)

    # Padded + multi-step case: exercises the unmasked steady path plus the
    # statically-masked boundary chunk in the last spatial block (B=3 checks
    # the divisor-based b_tile selection).
    _run_case(k2, B=3, C=16, H=20, W=20, ratio=4, s_tile_max=128)

    # Large-S case: exercises the lax.fori_loop chunk loop (n_sub > 16).
    _run_case(k3, B=2, C=8, H=64, W=64, ratio=4)

    print("KERNEL_OK")
</pallas_src>

<mosaic_0001>
module attributes {stable_mosaic.version = 11 : i64} {
  func.func @kernel(%arg0: i32, %arg1: i32, %arg2: memref<1x32x256xf32, #tpu.memory_space<vmem>>, %arg3: memref<32x8xf32, #tpu.memory_space<vmem>>, %arg4: memref<8x32xf32, #tpu.memory_space<vmem>>, %arg5: memref<1x1x32xf32, #tpu.memory_space<vmem>>, %arg6: memref<1x32x128xf32, #tpu.memory_space<vmem>>, %arg7: memref<1x32x128xf32, #tpu.memory_space<vmem>>) attributes {dimension_semantics = [#tpu.dimension_semantics<parallel>, #tpu.dimension_semantics<arbitrary>], iteration_bounds = array<i64: 2, 1>, scalar_prefetch = 0 : i64, scratch_operands = 2 : i64, tpu.core_type = #tpu.core_type<tc>, window_params = [{transform_indices = @transform_0, window_bounds = array<i64: 1, 32, 256>}, {pipeline_mode = #tpu.pipeline_mode<synchronous>, transform_indices = @transform_1, window_bounds = array<i64: 32, 8>}, {pipeline_mode = #tpu.pipeline_mode<synchronous>, transform_indices = @transform_2, window_bounds = array<i64: 8, 32>}, {transform_indices = @transform_3, window_bounds = array<i64: 1, 1, 32>}]} {
    %c0_i32 = arith.constant 0 : i32
    %0 = arith.cmpi eq, %arg1, %c0_i32 : i32
    %1 = arith.extui %0 : i1 to i32
    %c0_i32_0 = arith.constant 0 : i32
    %2 = arith.cmpi ne, %1, %c0_i32_0 : i32
    scf.if %2 {
      %cst = arith.constant 0.000000e+00 : f32
      %16 = vector.broadcast %cst : f32 to vector<1x32x128xf32>
      %c0_19 = arith.constant 0 : index
      %c0_20 = arith.constant 0 : index
      %c0_21 = arith.constant 0 : index
      %17 = vector.load %arg6[%c0_19, %c0_20, %c0_21] : memref<1x32x128xf32, #tpu.memory_space<vmem>>, vector<1x32x128xf32>
      tpu.vector_store %arg6[%c0_19, %c0_20, %c0_21], %16 {strides = array<i32>} : memref<1x32x128xf32, #tpu.memory_space<vmem>>, vector<1x32x128xf32>,
      %cst_22 = arith.constant 0xFF800000 : f32
      %18 = vector.broadcast %cst_22 : f32 to vector<1x32x128xf32>
      %c0_23 = arith.constant 0 : index
      %c0_24 = arith.constant 0 : index
      %c0_25 = arith.constant 0 : index
      %19 = vector.load %arg7[%c0_23, %c0_24, %c0_25] : memref<1x32x128xf32, #tpu.memory_space<vmem>>, vector<1x32x128xf32>
      tpu.vector_store %arg7[%c0_23, %c0_24, %c0_25], %18 {strides = array<i32>} : memref<1x32x128xf32, #tpu.memory_space<vmem>>, vector<1x32x128xf32>,
    } else {
    }
    %c0 = arith.constant 0 : index
    %c0_1 = arith.constant 0 : index
    %c0_2 = arith.constant 0 : index
    %3 = vector.load %arg6[%c0, %c0_1, %c0_2] : memref<1x32x128xf32, #tpu.memory_space<vmem>>, vector<1x32x128xf32>
    %c0_3 = arith.constant 0 : index
    %c0_4 = arith.constant 0 : index
    %c0_5 = arith.constant 0 : index
    %4 = vector.load %arg7[%c0_3, %c0_4, %c0_5] : memref<1x32x128xf32, #tpu.memory_space<vmem>>, vector<1x32x128xf32>
    %c0_6 = arith.constant 0 : index
    %c0_7 = arith.constant 0 : index
    %c0_8 = arith.constant 0 : index
    %5 = vector.load %arg2[%c0_6, %c0_7, %c0_8] : memref<1x32x256xf32, #tpu.memory_space<vmem>>, vector<1x32x128xf32>
    %6 = arith.addf %3, %5 : vector<1x32x128xf32>
    %7 = arith.maximumf %4, %5 : vector<1x32x128xf32>
    %c0_9 = arith.constant 0 : index
    %c0_10 = arith.constant 0 : index
    %c128 = arith.constant 128 : index
    %8 = vector.load %arg2[%c0_9, %c0_10, %c128] : memref<1x32x256xf32, #tpu.memory_space<vmem>>, vector<1x32x128xf32>
    %9 = arith.addf %6, %8 : vector<1x32x128xf32>
    %10 = arith.maximumf %7, %8 : vector<1x32x128xf32>
    %c0_11 = arith.constant 0 : index
    %c0_12 = arith.constant 0 : index
    %c0_13 = arith.constant 0 : index
    %11 = vector.load %arg6[%c0_11, %c0_12, %c0_13] : memref<1x32x128xf32, #tpu.memory_space<vmem>>, vector<1x32x128xf32>
    tpu.vector_store %arg6[%c0_11, %c0_12, %c0_13], %9 {strides = array<i32>} : memref<1x32x128xf32, #tpu.memory_space<vmem>>, vector<1x32x128xf32>,
    %c0_14 = arith.constant 0 : index
    %c0_15 = arith.constant 0 : index
    %c0_16 = arith.constant 0 : index
    %12 = vector.load %arg7[%c0_14, %c0_15, %c0_16] : memref<1x32x128xf32, #tpu.memory_space<vmem>>, vector<1x32x128xf32>
    tpu.vector_store %arg7[%c0_14, %c0_15, %c0_16], %10 {strides = array<i32>} : memref<1x32x128xf32, #tpu.memory_space<vmem>>, vector<1x32x128xf32>,
    %c0_i32_17 = arith.constant 0 : i32
    %13 = arith.cmpi eq, %arg1, %c0_i32_17 : i32
    %14 = arith.extui %13 : i1 to i32
    %c0_i32_18 = arith.constant 0 : i32
    %15 = arith.cmpi ne, %14, %c0_i32_18 : i32
    scf.if %15 {
      %c0_19 = arith.constant 0 : index
      %c0_20 = arith.constant 0 : index
      %c0_21 = arith.constant 0 : index
      %16 = vector.load %arg6[%c0_19, %c0_20, %c0_21] : memref<1x32x128xf32, #tpu.memory_space<vmem>>, vector<1x32x128xf32>
      %cst = arith.constant dense<0.000000e+00> : vector<1x32xf32>
      %17 = vector.multi_reduction <add>, %16, %cst [2] : vector<1x32x128xf32> to vector<1x32xf32>
      %cst_22 = arith.constant 3.906250e-03 : f32
      %18 = vector.broadcast %cst_22 : f32 to vector<1x32xf32>
      %19 = arith.mulf %17, %18 : vector<1x32xf32>
      %c0_23 = arith.constant 0 : index
      %c0_24 = arith.constant 0 : index
      %c0_25 = arith.constant 0 : index
      %20 = vector.load %arg7[%c0_23, %c0_24, %c0_25] : memref<1x32x128xf32, #tpu.memory_space<vmem>>, vector<1x32x128xf32>
      %cst_26 = arith.constant dense<0xFF800000> : vector<1x32xf32>
      %21 = vector.multi_reduction <maximumf>, %20, %cst_26 [2] : vector<1x32x128xf32> to vector<1x32xf32>
      %22 = tpu.concatenate %19, %21 in 0 : vector<1x32xf32>, vector<1x32xf32> -> vector<2x32xf32>
      %c0_27 = arith.constant 0 : index
      %c0_28 = arith.constant 0 : index
      %23 = vector.load %arg3[%c0_27, %c0_28] : memref<32x8xf32, #tpu.memory_space<vmem>>, vector<32x8xf32>
      %cst_29 = arith.constant dense<0.000000e+00> : vector<2x8xf32>
      %24 = tpu.matmul %22, %23, %cst_29 {dimension_numbers = #tpu.dot_dimension_numbers<[1], [0], [0], [1], [0, 0, 1, 1], [], []>} : vector<2x32xf32>, vector<32x8xf32>, vector<2x8xf32> -> vector<2x8xf32>
      %cst_30 = arith.constant 0.000000e+00 : f32
      %25 = vector.broadcast %cst_30 : f32 to vector<2x8xf32>
      %26 = arith.cmpf ogt, %24, %25 : vector<2x8xf32>
      %cst_31 = arith.constant 3.000000e-01 : f32
      %27 = vector.broadcast %cst_31 : f32 to vector<2x8xf32>
      %28 = arith.mulf %27, %24 : vector<2x8xf32>
      %29 = arith.select %26, %24, %28 : vector<2x8xi1>, vector<2x8xf32>
      %c0_32 = arith.constant 0 : index
      %c0_33 = arith.constant 0 : index
      %30 = vector.load %arg4[%c0_32, %c0_33] : memref<8x32xf32, #tpu.memory_space<vmem>>, vector<8x32xf32>
      %cst_34 = arith.constant dense<0.000000e+00> : vector<2x32xf32>
      %31 = tpu.matmul %29, %30, %cst_34 {dimension_numbers = #tpu.dot_dimension_numbers<[1], [0], [0], [1], [0, 0, 1, 1], [], []>} : vector<2x8xf32>, vector<8x32xf32>, vector<2x32xf32> -> vector<2x32xf32>
      %32 = vector.extract_strided_slice %31 {offsets = [0, 0], sizes = [1, 32], strides = [1, 1]} : vector<2x32xf32> to vector<1x32xf32>
      %33 = vector.extract_strided_slice %31 {offsets = [1, 0], sizes = [1, 32], strides = [1, 1]} : vector<2x32xf32> to vector<1x32xf32>
      %34 = arith.addf %32, %33 : vector<1x32xf32>
      %35 = arith.negf %34 : vector<1x32xf32>
      %36 = math.exp %35 : vector<1x32xf32>
      %cst_35 = arith.constant 1.000000e+00 : f32
      %37 = vector.broadcast %cst_35 : f32 to vector<1x32xf32>
      %38 = arith.addf %37, %36 : vector<1x32xf32>
      %39 = arith.divf %37, %38 : vector<1x32xf32>
      %40 = vector.shape_cast %39 : vector<1x32xf32> to vector<1x1x32xf32>
      %c0_36 = arith.constant 0 : index
      %c0_37 = arith.constant 0 : index
      %c0_38 = arith.constant 0 : index
      %41 = vector.load %arg5[%c0_36, %c0_37, %c0_38] : memref<1x1x32xf32, #tpu.memory_space<vmem>>, vector<1x1x32xf32>
      tpu.vector_store %arg5[%c0_36, %c0_37, %c0_38], %40 {strides = array<i32>} : memref<1x1x32xf32, #tpu.memory_space<vmem>>, vector<1x1x32xf32>,
    } else {
    }
    return
  }
  func.func @transform_0(%arg0: i32, %arg1: i32) -> (i32, i32, i32) {
    %c0_i32 = arith.constant 0 : i32
    %c0_i32_0 = arith.constant 0 : i32
    return %arg0, %c0_i32, %arg1 : i32, i32, i32
  }
  func.func @transform_1(%arg0: i32, %arg1: i32) -> (i32, i32) {
    %c0_i32 = arith.constant 0 : i32
    %c0_i32_0 = arith.constant 0 : i32
    %c0_i32_1 = arith.constant 0 : i32
    return %c0_i32, %c0_i32_0 : i32, i32
  }
  func.func @transform_2(%arg0: i32, %arg1: i32) -> (i32, i32) {
    %c0_i32 = arith.constant 0 : i32
    %c0_i32_0 = arith.constant 0 : i32
    %c0_i32_1 = arith.constant 0 : i32
    return %c0_i32, %c0_i32_0 : i32, i32
  }
  func.func @transform_3(%arg0: i32, %arg1: i32) -> (i32, i32, i32) {
    %c0_i32 = arith.constant 0 : i32
    %c0_i32_0 = arith.constant 0 : i32
    %c0_i32_1 = arith.constant 0 : i32
    return %arg0, %c0_i32, %c0_i32_0 : i32, i32, i32
  }
}

</mosaic_0001>

<llo_original>
// kernel: tpu_custom_call.1
$region0: #{tpu_custom_call.1}
  #allocation0 [shape = 'u32[]', space=smem, size = 0x4, offset = 0x4, fixed_abs, tag = 'smem constant byte address 0x4 - core index']
  #allocation1 [shape = 'u32[144,128]{1,0:T(1,128)}', space=vmem, size = 0x12000, scoped, tag = 'internal scratch']
  #allocation2 [shape = 'f32[1,32,128]{2,1,0:T(8,128)}', space=vmem, size = 0x4000, scoped, tag = 'scratch operand']
  #allocation3 [shape = 'f32[1,32,128]{2,1,0:T(8,128)}', space=vmem, size = 0x4000, scoped, tag = 'scratch operand']
  %s0 = inlined_call_operand.hbm [shape: f32[2,32,256], index: 0, kind: input, shape index: {}]
  %s1 = inlined_call_operand.vmem [shape: f32[32,8], index: 1, kind: input, shape index: {}]
  %s2 = inlined_call_operand.vmem [shape: f32[8,32], index: 2, kind: input, shape index: {}]
  %s3 = inlined_call_operand.hbm [shape: f32[2,1,32], index: 3, kind: output, shape index: {}]
  %s4 = sld [smem:[#allocation0]]
  $region57: #{tpu_custom_call.1} parent=0
    _
  %s6 = ssub.s32 1, %s4
  %s7 = scalar_select 0, %s6, %s4
  $region1: #{tpu_custom_call.1} parent=0
    #allocation4 [shape = 'u8[65536]{0}', space=vmem, size = 0x10000, scoped, tag = 'input window, operand 0']
    #allocation5 [shape = 's32[2]{0}', space=sflag, size = 0x8, scoped, tag = 'scoped memory for tpu_custom_call.1']
    #allocation6 [shape = 's32[2]{0}', space=sflag, size = 0x8, scoped, tag = 'scoped memory for tpu_custom_call.1']
    #allocation7 [shape = 'u8[1024]{0}', space=vmem, size = 0x400, scoped, tag = 'output window, operand 0']
    %8 = vsyncpa [#allocation5], 0
    %s9 = scalar_lea.sflag [#allocation5], 1
    %10 = vsyncpa %s9, 0
    %11 = vsyncpa [#allocation6], 0
    %s12 = scalar_lea.sflag [#allocation6], 1
    %13 = vsyncpa %s12, 0
    loop: start=0, step=1, limit=4
    $region2: #{tpu_custom_call.1} parent=1 // loop_pre_header
      _
    $region3: #{tpu_custom_call.1} parent=1 // loop_header
      %s15 = sphi 0, %s19
      %p16 = scmp.ge.s32.totalorder %s15, 4
      %s22 = sphi 0, %s34
      %s23 = sphi 0, %s30
      %s24 = sphi 0, %s22
      %s25 = sphi 0, %s23
      %s26 = sphi 0, %s24
      %s27 = sphi 0, %s25
      %s39 = sphi 0, %s41
      %s42 = sphi 0, %s39
      %s43 = sphi 0, %s42
      %s59 = sphi 0, %s43
      %s63 = sphi 0, %s63
      %s65 = sphi 0, %s63
      %s66 = sphi 0, %s65
      %s80 = sphi 0, %s66
      %s84 = sphi 0, %s84
      %s86 = sphi 0, %s84
      %s87 = sphi 0, %s86
      %s101 = sphi 0, %s87
      %s107 = sphi 0, %s109
      %s110 = sphi 0, %s107
      %s111 = sphi 0, %s110
      %s127 = sphi 0, %s111
    $region4: #{tpu_custom_call.1} parent=1 // loop_header_branch
      %18 = sbr.rel (%p16) target = $region8
    $region5: #{tpu_custom_call.1} parent=1 // loop_body
      %s20 = ssub.s32 %s15, 1
      %s21 = ssub.s32 %s15, 2
      %s28 = sadd.s32 1, %s23
      %p29 = scmp.ge.s32.totalorder %s28, 1
      %s30 = scalar_select %p29, 0, %s28
      %s31 = sadd.s32 1, %s22
      %s32 = scalar_select %p29, %s31, %s22
      %p33 = scmp.ge.s32.totalorder %s32, 2
      %s34 = scalar_select %p33, 0, %s32
      %s35 = ssub.s32 %s22, %s34
      %s36 = ssub.s32 %s23, %s30
      %s37 = sor.u32 %s35, %s36
      %p38 = scmp.eq.s32.totalorder %s37, 0
      %s40 = sadd.s32 %s39, 1
      %s41 = scalar_select %p38, %s39, %s40
      %p44 = pneg %p38
      %p45 = scmp.eq.s32.totalorder %s15, 1
      %p46 = por %p44, %p45
      %p47 = scmp.ne.s32.totalorder %s39, %s42
      %p48 = scmp.eq.s32.totalorder %s15, 0
      %p49 = por %p47, %p48
      %p50 = scmp.ne.s32.totalorder %s39, %s42
      %p51 = scmp.eq.s32.totalorder %s20, 1
      %p52 = por %p50, %p51
      %p53 = scmp.ne.s32.totalorder %s42, %s43
      %p54 = scmp.eq.s32.totalorder %s20, 0
      %p55 = por %p53, %p54
      %p56 = scmp.ne.s32.totalorder %s42, %s43
      %p57 = scmp.eq.s32.totalorder %s21, 1
      %p58 = por %p56, %p57
      %p60 = scmp.ne.s32.totalorder %s43, %s59
      %p61 = scmp.eq.s32.totalorder %s21, 0
      %p62 = por %p60, %p61
      %s64 = sadd.s32 %s63, 1
      %p67 = scmp.eq.s32.totalorder %s15, 1
      %p68 = scmp.ne.s32.totalorder %s63, %s65
      %p69 = scmp.eq.s32.totalorder %s15, 0
      %p70 = por %p68, %p69
      %p71 = scmp.ne.s32.totalorder %s63, %s65
      %p72 = scmp.eq.s32.totalorder %s20, 1
      %p73 = por %p71, %p72
      %p74 = scmp.ne.s32.totalorder %s65, %s66
      %p75 = scmp.eq.s32.totalorder %s20, 0
      %p76 = por %p74, %p75
      %p77 = scmp.ne.s32.totalorder %s65, %s66
      %p78 = scmp.eq.s32.totalorder %s21, 1
      %p79 = por %p77, %p78
      %p81 = scmp.ne.s32.totalorder %s66, %s80
      %p82 = scmp.eq.s32.totalorder %s21, 0
      %p83 = por %p81, %p82
      %s85 = sadd.s32 %s84, 1
      %p88 = scmp.eq.s32.totalorder %s15, 1
      %p89 = scmp.ne.s32.totalorder %s84, %s86
      %p90 = scmp.eq.s32.totalorder %s15, 0
      %p91 = por %p89, %p90
      %p92 = scmp.ne.s32.totalorder %s84, %s86
      %p93 = scmp.eq.s32.totalorder %s20, 1
      %p94 = por %p92, %p93
      %p95 = scmp.ne.s32.totalorder %s86, %s87
      %p96 = scmp.eq.s32.totalorder %s20, 0
      %p97 = por %p95, %p96
      %p98 = scmp.ne.s32.totalorder %s86, %s87
      %p99 = scmp.eq.s32.totalorder %s21, 1
      %p100 = por %p98, %p99
      %p102 = scmp.ne.s32.totalorder %s87, %s101
      %p103 = scmp.eq.s32.totalorder %s21, 0
      %p104 = por %p102, %p103
      %s105 = ssub.s32 %s22, %s34
      %p106 = scmp.eq.s32.totalorder %s105, 0
      %s108 = sadd.s32 %s107, 1
      %s109 = scalar_select %p106, %s107, %s108
      %p112 = pneg %p106
      %p113 = scmp.eq.s32.totalorder %s15, 1
      %p114 = por %p112, %p113
      %p115 = scmp.ne.s32.totalorder %s107, %s110
      %p116 = scmp.eq.s32.totalorder %s15, 0
      %p117 = por %p115, %p116
      %p118 = scmp.ne.s32.totalorder %s107, %s110
      %p119 = scmp.eq.s32.totalorder %s20, 1
      %p120 = por %p118, %p119
      %p121 = scmp.ne.s32.totalorder %s110, %s111
      %p122 = scmp.eq.s32.totalorder %s20, 0
      %p123 = por %p121, %p122
      %p124 = scmp.ne.s32.totalorder %s110, %s111
      %p125 = scmp.eq.s32.totalorder %s21, 1
      %p126 = por %p124, %p125
      %p128 = scmp.ne.s32.totalorder %s111, %s127
      %p129 = scmp.eq.s32.totalorder %s21, 0
      %p130 = por %p128, %p129
      %p131 = scmp.le.s32.totalorder 1, %s15
      %p132 = scmp.lt.s32.totalorder %s15, 3
      %p133 = pnand %p131, %p132
      %p134 = pneg %p133
      // Predicated region
      $region9: #{tpu_custom_call.1} parent=5 // pred_check
        _
      $region10: #{tpu_custom_call.1} parent=5 // pred_check_branch
        %136 = sbr.rel (%p133) target = $region12
      $region11: #{tpu_custom_call.1} parent=5 // pred_region
        %s137 = ssub.s32 %s15, 1
        // Predicated region
        $region13: #{tpu_custom_call.1} parent=11 // pred_check
          %p138 = pneg %p76
        $region14: #{tpu_custom_call.1} parent=11 // pred_check_branch
          %140 = sbr.rel (%p138) target = $region16
        $region15: #{tpu_custom_call.1} parent=11 // pred_region
          _
        $region16: #{tpu_custom_call.1} parent=11 // pred_fallthru
          _
        // Predicated region
        $region17: #{tpu_custom_call.1} parent=11 // pred_check
          %p141 = pneg %p97
        $region18: #{tpu_custom_call.1} parent=11 // pred_check_branch
          %143 = sbr.rel (%p141) target = $region20
        $region19: #{tpu_custom_call.1} parent=11 // pred_region
          _
        $region20: #{tpu_custom_call.1} parent=11 // pred_fallthru
          _
      $region12: #{tpu_custom_call.1} parent=5 // pred_fallthru
        _
      %p144 = scmp.lt.s32.totalorder %s15, 2
      // Predicated region
      $region21: #{tpu_custom_call.1} parent=5 // pred_check
        %p145 = pneg %p144
      $region22: #{tpu_custom_call.1} parent=5 // pred_check_branch
        %147 = sbr.rel (%p145) target = $region24
      $region23: #{tpu_custom_call.1} parent=5 // pred_region
        // Predicated region
        $region25: #{tpu_custom_call.1} parent=23 // pred_check
          %p148 = pneg %p49
        $region26: #{tpu_custom_call.1} parent=23 // pred_check_branch
          %150 = sbr.rel (%p148) target = $region28
        $region27: #{tpu_custom_call.1} parent=23 // pred_region
          %s151 = sand.u32 %s39, 1
          %s152 = scalar_lea.sflag [#allocation5], %s151
          %s153 = sand.u32 %s39, 1
          %s154 = smul.addr %s153, 64
          %s155 = scalar_lea.vmem [#allocation4], %s154
          %s156 = smul.u32 2, %s23
          %s158 = ssub.s32 1024, 1024
          %159 = vsyncadd %s152, %s158
          %s160 = smul.addr %s22, 8
          %s161 = sadd.s32 %s156, %s160
          %s162 = smul.addr %s161, 128
          %s163 = scalar_lea.hbm %s0, %s162
          %s164 = sshll.u32 %s155, 4
          %s165 = int_to_ptr.vmem [resolvable:$true] %s164
          %170 = dma.hbm_to_vmem [thread:$0]  %s163, 1024, %s165, %s152, 256, 256, 16
        $region28: #{tpu_custom_call.1} parent=23 // pred_fallthru
          _
      $region24: #{tpu_custom_call.1} parent=5 // pred_fallthru
        _
      %p171 = scmp.le.s32.totalorder 1, %s15
      %p172 = scmp.lt.s32.totalorder %s15, 3
      %p173 = pnand %p171, %p172
      %p174 = pneg %p173
      // Predicated region
      $region29: #{tpu_custom_call.1} parent=5 // pred_check
        _
      $region30: #{tpu_custom_call.1} parent=5 // pred_check_branch
        %176 = sbr.rel (%p173) target = $region32
      $region31: #{tpu_custom_call.1} parent=5 // pred_region
        %s177 = ssub.s32 %s15, 1
        %s178 = sand.u32 %s42, 1
        %s179 = scalar_lea.sflag [#allocation5], %s178
        %s180 = sand.u32 %s42, 1
        %s181 = smul.addr %s180, 64
        %s182 = scalar_lea.vmem [#allocation4], %s181
        // Predicated region
        $region33: #{tpu_custom_call.1} parent=31 // pred_check
          %p183 = pneg %p55
        $region34: #{tpu_custom_call.1} parent=31 // pred_check_branch
          %185 = sbr.rel (%p183) target = $region36
        $region35: #{tpu_custom_call.1} parent=31 // pred_region
          %186 = dma.done %s179, 1024
        $region36: #{tpu_custom_call.1} parent=31 // pred_fallthru
          _
        %s187 = sand.u32 %s42, 1
        %s188 = scalar_lea.sflag [#allocation5], %s187
        %s189 = sand.u32 %s42, 1
        %s190 = smul.addr %s189, 64
        %s191 = scalar_lea.vmem [#allocation4], %s190
        %p192 = pneg %p55
        %p193 = pneg %p52
        %p194 = pneg %p76
        %p195 = pneg %p73
        %p196 = pneg %p97
        %p197 = pneg %p94
        %p198 = pneg %p123
        %p199 = pneg %p120
        %s200 = sand.u32 %s110, 1
        %s201 = scalar_lea.sflag [#allocation6], %s200
        %s202 = sand.u32 %s110, 1
        %s203 = scalar_lea.vmem [#allocation7], %s202
        %s204 = smul.u32 2, %s25
        %p205 = scmp.eq.s32.totalorder %s25, 0
        // Predicated region
        $region37: #{tpu_custom_call.1} parent=31 // pred_check
          %p206 = pneg %p205
        $region38: #{tpu_custom_call.1} parent=31 // pred_check_branch
          %208 = sbr.rel (%p206) target = $region40
        $region39: #{tpu_custom_call.1} parent=31 // pred_region
          %209 = vst [vmem:[#allocation2] sm:$0xff] 0.0
          %210 = vst [vmem:[#allocation2 + $0x8] sm:$0xff] 0.0
          %211 = vst [vmem:[#allocation2 + $0x10] sm:$0xff] 0.0
          %212 = vst [vmem:[#allocation2 + $0x18] sm:$0xff] 0.0
          %213 = vst [vmem:[#allocation3] sm:$0xff] -inf
          %214 = vst [vmem:[#allocation3 + $0x8] sm:$0xff] -inf
          %215 = vst [vmem:[#allocation3 + $0x10] sm:$0xff] -inf
          %216 = vst [vmem:[#allocation3 + $0x18] sm:$0xff] -inf
        $region40: #{tpu_custom_call.1} parent=31 // pred_fallthru
          _
        %v217 = vld [vmem:[#allocation2] sm:$0xff]
        %v218 = vld [vmem:[#allocation2 + $0x8] sm:$0xff]
        %v219 = vld [vmem:[#allocation2 + $0x10] sm:$0xff]
        %v220 = vld [vmem:[#allocation2 + $0x18] sm:$0xff]
        %v221 = vld [vmem:[#allocation3] sm:$0xff]
        %v222 = vld [vmem:[#allocation3 + $0x8] sm:$0xff]
        %v223 = vld [vmem:[#allocation3 + $0x10] sm:$0xff]
        %v224 = vld [vmem:[#allocation3 + $0x18] sm:$0xff]
        %v225 = vld [vmem:[%s182] sm:$0xff]
        %v226 = vld [vmem:[%s182 + $0x10] sm:$0xff]
        %v227 = vld [vmem:[%s182 + $0x20] sm:$0xff]
        %v228 = vld [vmem:[%s182 + $0x30] sm:$0xff]
        %v229 = vadd.f32 %v217, %v225
        %v230 = vadd.f32 %v218, %v226
        %v231 = vadd.f32 %v219, %v227
        %v232 = vadd.f32 %v220, %v228
        %v233 = vmax.f32 %v221, %v225
        %v234 = vmax.f32 %v222, %v226
        %v235 = vmax.f32 %v223, %v227
        %v236 = vmax.f32 %v224, %v228
        %v237 = vld [vmem:[%s182 + $0x8] sm:$0xff]
        %v238 = vld [vmem:[%s182 + $0x18] sm:$0xff]
        %v239 = vld [vmem:[%s182 + $0x28] sm:$0xff]
        %v240 = vld [vmem:[%s182 + $0x38] sm:$0xff]
        %v241 = vadd.f32 %v229, %v237
        %v242 = vadd.f32 %v230, %v238
        %v243 = vadd.f32 %v231, %v239
        %v244 = vadd.f32 %v232, %v240
        %v245 = vmax.f32 %v233, %v237
        %v246 = vmax.f32 %v234, %v238
        %v247 = vmax.f32 %v235, %v239
        %v248 = vmax.f32 %v236, %v240
        %249 = vst [vmem:[#allocation2] sm:$0xff] %v241
        %250 = vst [vmem:[#allocation2 + $0x8] sm:$0xff] %v242
        %251 = vst [vmem:[#allocation2 + $0x10] sm:$0xff] %v243
        %252 = vst [vmem:[#allocation2 + $0x18] sm:$0xff] %v244
        %253 = vst [vmem:[#allocation3] sm:$0xff] %v245
        %254 = vst [vmem:[#allocation3 + $0x8] sm:$0xff] %v246
        %255 = vst [vmem:[#allocation3 + $0x10] sm:$0xff] %v247
        %256 = vst [vmem:[#allocation3 + $0x18] sm:$0xff] %v248
        // Predicated region
        $region41: #{tpu_custom_call.1} parent=31 // pred_check
          %p257 = pneg %p205
        $region42: #{tpu_custom_call.1} parent=31 // pred_check_branch
          %259 = sbr.rel (%p257) target = $region44
        $region43: #{tpu_custom_call.1} parent=31 // pred_region
          %v260 = vld [vmem:[#allocation2] sm:$0xff]
          %v261 = vld [vmem:[#allocation2 + $0x8] sm:$0xff]
          %v262 = vld [vmem:[#allocation2 + $0x10] sm:$0xff]
          %v263 = vld [vmem:[#allocation2 + $0x18] sm:$0xff]
          %264 = vadd.xlane.f32.xlu0 %v260
          %v265 = vpop.xlane.xlu0 %264
          %266 = vadd.xlane.f32.xlu0 %v261
          %v267 = vpop.xlane.xlu0 %266
          %268 = vadd.xlane.f32.xlu0 %v262
          %v269 = vpop.xlane.xlu0 %268
          %270 = vadd.xlane.f32.xlu0 %v263
          %v271 = vpop.xlane.xlu0 %270
          %v272 = vmul.f32 %v265, 0.00390625
          %v273 = vmul.f32 %v267, 0.00390625
          %v274 = vmul.f32 %v269, 0.00390625
          %v275 = vmul.f32 %v271, 0.00390625
          %v276 = vld [vmem:[#allocation3] sm:$0xff]
          %v277 = vld [vmem:[#allocation3 + $0x8] sm:$0xff]
          %v278 = vld [vmem:[#allocation3 + $0x10] sm:$0xff]
          %v279 = vld [vmem:[#allocation3 + $0x18] sm:$0xff]
          %280 = vmax.xlane.f32.xlu0 %v276
          %v281 = vpop.xlane.xlu0 %280
          %282 = vmax.xlane.f32.xlu0 %v277
          %v283 = vpop.xlane.xlu0 %282
          %284 = vmax.xlane.f32.xlu0 %v278
          %v285 = vpop.xlane.xlu0 %284
          %286 = vmax.xlane.f32.xlu0 %v279
          %v287 = vpop.xlane.xlu0 %286
          %v292 = vlaneseq
          %v293 = vand.u32 %v292, 127
          %v294 = vlaneseq
          %v295 = vshrl.u32 %v294, 7
          %v296 = vsub.s32 %v293, %v295
          %v297 = vrot.slane %v272, %v296
          %v298 = vadd.s32 %v293, 4294967288
          %v299 = vlaneseq
          %v300 = vshrl.u32 %v299, 7
          %v301 = vsub.s32 %v298, %v300
          %v302 = vrot.slane %v273, %v301
          %vm303 = vcmask 130112
          %v304 = vsel %vm303, %v302, %v297
          %v305 = vadd.s32 %v293, 4294967280
          %v306 = vlaneseq
          %v307 = vshrl.u32 %v306, 7
          %v308 = vsub.s32 %v305, %v307
          %v309 = vrot.slane %v274, %v308
          %vm310 = vcmask 195712
          %v311 = vsel %vm310, %v309, %v304
          %v312 = vadd.s32 %v293, 4294967272
          %v313 = vlaneseq
          %v314 = vshrl.u32 %v313, 7
          %v315 = vsub.s32 %v312, %v314
          %v316 = vrot.slane %v275, %v315
          %vm317 = vcmask 261312
          %v318 = vsel %vm317, %v316, %v311
          %v324 = vlaneseq
          %v325 = vshrl.u32 %v324, 7
          %v326 = vsub.s32 %v293, %v325
          %v327 = vrot.slane %v281, %v326
          %v328 = vlaneseq
          %v329 = vshrl.u32 %v328, 7
          %v330 = vsub.s32 %v298, %v329
          %v331 = vrot.slane %v283, %v330
          %v332 = vsel %vm303, %v331, %v327
          %v333 = vlaneseq
          %v334 = vshrl.u32 %v333, 7
          %v335 = vsub.s32 %v305, %v334
          %v336 = vrot.slane %v285, %v335
          %v337 = vsel %vm310, %v336, %v332
          %v338 = vlaneseq
          %v339 = vshrl.u32 %v338, 7
          %v340 = vsub.s32 %v312, %v339
          %v341 = vrot.slane %v287, %v340
          %v342 = vsel %vm317, %v341, %v337
          %vm344 = vcmask 1040384
          %v345 = vsel %vm344, %v318, %v342
          %v346 = vld [vmem:[%s1] sm:$0xff]
          %v347 = vld [vmem:[%s1 + $0x8] sm:$0xff]
          %v348 = vld [vmem:[%s1 + $0x10] sm:$0xff]
          %v349 = vld [vmem:[%s1 + $0x18] sm:$0xff]
          %vm350 = vcmask 261120
          %v352 = vsel %vm350, %v345, 0
          %354 = vmatprep.subr.mxu0 0.0
          %355 = vmatpush1.msra.mxu0 %v346
          %356 = vmatprep.subr.mxu0 0.0
          %357 = vmatpush1.msra.mxu0 %v347
          %358 = vmatprep.subr.mxu0 0.0
          %359 = vmatpush1.msra.mxu0 %v348
          %360 = vmatprep.subr.mxu0 0.0
          %361 = vmatpush1.msra.mxu0 %v349
          %362 = vmatprep.subr.mxu0 0.0
          %363 = vmatpush1.msra.mxu0 0.0
          %364 = vmatprep.subr.mxu0 0.0
          %365 = vmatpush1.msra.mxu0 0.0
          %366 = vmatprep.subr.mxu0 0.0
          %367 = vmatpush1.msra.mxu0 0.0
          %368 = vmatprep.subr.mxu0 0.0
          %369 = vmatpush1.msra.mxu0 0.0
          %370 = vmatprep.subr.mxu0 0.0
          %371 = vmatpush1.msra.mxu0 0.0
          %372 = vmatprep.subr.mxu0 0.0
          %373 = vmatpush1.msra.mxu0 0.0
          %374 = vmatprep.subr.mxu0 0.0
          %375 = vmatpush1.msra.mxu0 0.0
          %376 = vmatprep.subr.mxu0 0.0
          %377 = vmatpush1.msra.mxu0 0.0
          %378 = vmatprep.subr.mxu0 0.0
          %379 = vmatpush1.msra.mxu0 0.0
          %380 = vmatprep.subr.mxu0 0.0
          %381 = vmatpush1.msra.mxu0 0.0
          %382 = vmatprep.subr.mxu0 0.0
          %383 = vmatpush1.msra.mxu0 0.0
          %384 = vmatprep.subr.mxu0 0.0
          %385 = vmatpush1.msra.mxu0 0.0
          %386 = vmatprep.subr.mxu0 0.0
          %387 = vmatpush1.msra.mxu0 0.0
          %388 = vmatprep.subr.mxu0 0.0
          %389 = vmatpush1.msra.mxu0 0.0
          %390 = vmatprep.subr.mxu0 0.0
          %391 = vmatpush1.msra.mxu0 0.0
          %392 = vmatprep.subr.mxu0 0.0
          %393 = vmatpush1.msra.mxu0 0.0
          %394 = vmatprep.subr.mxu0 0.0
          %395 = vmatpush1.msra.mxu0 0.0
          %396 = vmatprep.subr.mxu0 0.0
          %397 = vmatpush1.msra.mxu0 0.0
          %398 = vmatprep.subr.mxu0 0.0
          %399 = vmatpush1.msra.mxu0 0.0
          %400 = vmatprep.subr.mxu0 0.0
          %401 = vmatpush1.msra.mxu0 0.0
          %402 = vmatprep.subr.mxu0 0.0
          %403 = vmatpush1.msra.mxu0 0.0
          %404 = vmatprep.subr.mxu0 0.0
          %405 = vmatpush1.msra.mxu0 0.0
          %406 = vmatprep.subr.mxu0 0.0
          %407 = vmatpush1.msra.mxu0 0.0
          %408 = vmatprep.subr.mxu0 0.0
          %409 = vmatpush1.msra.mxu0 0.0
          %410 = vmatprep.subr.mxu0 0.0
          %411 = vmatpush1.msra.mxu0 0.0
          %412 = vmatprep.subr.mxu0 0.0
          %413 = vmatpush1.msra.mxu0 0.0
          %414 = vmatprep.subr.mxu0 0.0
          %415 = vmatpush1.msra.mxu0 0.0
          %416 = vmatprep.subr.mxu0 0.0
          %417 = vmatpush1.msra.mxu0 0.0
          %418 = vmatprep.mubr.f32.mxu0 0.0
          %419 = vmatmul.mubr.f32.gmra.mrb[0].mxu0 %v352
          %v420 = vpop.f32.mrb[0].mxu0
          %v421 = vadd.f32 0.0, %v420
          %v422 = vpop.f32.mrb[0].mxu0
          %423 = vdwg.mxu0
          %vm424 = vcmp.gt.f32.partialorder %v421, 0.0
          %v425 = vmul.f32 %v421, 0.3
          %v426 = vsel %vm424, %v421, %v425
          %v427 = vld [vmem:[%s2] sm:$0xff]
          %vm428 = vcmask 64512
          %v430 = vsel %vm428, %v426, 0
          %432 = vmatprep.subr.mxu0 0.0
          %433 = vmatpush1.msra.mxu0 %v427
          %434 = vmatprep.subr.mxu0 0.0
          %435 = vmatpush1.msra.mxu0 0.0
          %436 = vmatprep.subr.mxu0 0.0
          %437 = vmatpush1.msra.mxu0 0.0
          %438 = vmatprep.subr.mxu0 0.0
          %439 = vmatpush1.msra.mxu0 0.0
          %440 = vmatprep.subr.mxu0 0.0
          %441 = vmatpush1.msra.mxu0 0.0
          %442 = vmatprep.subr.mxu0 0.0
          %443 = vmatpush1.msra.mxu0 0.0
          %444 = vmatprep.subr.mxu0 0.0
          %445 = vmatpush1.msra.mxu0 0.0
          %446 = vmatprep.subr.mxu0 0.0
          %447 = vmatpush1.msra.mxu0 0.0
          %448 = vmatprep.subr.mxu0 0.0
          %449 = vmatpush1.msra.mxu0 0.0
          %450 = vmatprep.subr.mxu0 0.0
          %451 = vmatpush1.msra.mxu0 0.0
          %452 = vmatprep.subr.mxu0 0.0
          %453 = vmatpush1.msra.mxu0 0.0
          %454 = vmatprep.subr.mxu0 0.0
          %455 = vmatpush1.msra.mxu0 0.0
          %456 = vmatprep.subr.mxu0 0.0
          %457 = vmatpush1.msra.mxu0 0.0
          %458 = vmatprep.subr.mxu0 0.0
          %459 = vmatpush1.msra.mxu0 0.0
          %460 = vmatprep.subr.mxu0 0.0
          %461 = vmatpush1.msra.mxu0 0.0
          %462 = vmatprep.subr.mxu0 0.0
          %463 = vmatpush1.msra.mxu0 0.0
          %464 = vmatprep.subr.mxu0 0.0
          %465 = vmatpush1.msra.mxu0 0.0
          %466 = vmatprep.subr.mxu0 0.0
          %467 = vmatpush1.msra.mxu0 0.0
          %468 = vmatprep.subr.mxu0 0.0
          %469 = vmatpush1.msra.mxu0 0.0
          %470 = vmatprep.subr.mxu0 0.0
          %471 = vmatpush1.msra.mxu0 0.0
          %472 = vmatprep.subr.mxu0 0.0
          %473 = vmatpush1.msra.mxu0 0.0
          %474 = vmatprep.subr.mxu0 0.0
          %475 = vmatpush1.msra.mxu0 0.0
          %476 = vmatprep.subr.mxu0 0.0
          %477 = vmatpush1.msra.mxu0 0.0
          %478 = vmatprep.subr.mxu0 0.0
          %479 = vmatpush1.msra.mxu0 0.0
          %480 = vmatprep.subr.mxu0 0.0
          %481 = vmatpush1.msra.mxu0 0.0
          %482 = vmatprep.subr.mxu0 0.0
          %483 = vmatpush1.msra.mxu0 0.0
          %484 = vmatprep.subr.mxu0 0.0
          %485 = vmatpush1.msra.mxu0 0.0
          %486 = vmatprep.subr.mxu0 0.0
          %487 = vmatpush1.msra.mxu0 0.0
          %488 = vmatprep.subr.mxu0 0.0
          %489 = vmatpush1.msra.mxu0 0.0
          %490 = vmatprep.subr.mxu0 0.0
          %491 = vmatpush1.msra.mxu0 0.0
          %492 = vmatprep.subr.mxu0 0.0
          %493 = vmatpush1.msra.mxu0 0.0
          %494 = vmatprep.subr.mxu0 0.0
          %495 = vmatpush1.msra.mxu0 0.0
          %496 = vmatprep.mubr.f32.mxu0 0.0
          %497 = vmatmul.mubr.f32.gmra.mrb[0].mxu0 %v430
          %v498 = vpop.f32.mrb[0].mxu0
          %v499 = vadd.f32 0.0, %v498
          %v500 = vpop.f32.mrb[0].mxu0
          %501 = vdwg.mxu0
          %v503 = vrot.slane %v499, 1
          %v505 = vadd.f32 %v499, %v503
          %v506 = vxor.u32 %v505, 2147483648
          %v507 = vmul.f32 %v506, 1.442695
          %v508 = vpow.pop %v507
          %v509 = vadd.f32 %v508, 1.0
          %v510 = vrcp.pop %v509
          %v511 = vmul.f32 1.0, %v510
          %vm512 = vcmask 253952
          %513 = vst.msk [vmem:[%s203] sm:$0x1] %vm512, %v511
        $region44: #{tpu_custom_call.1} parent=31 // pred_fallthru
          _
        %s514 = sand.u32 %s110, 1
        %s515 = scalar_lea.sflag [#allocation6], %s514
        %s516 = sand.u32 %s110, 1
        %s517 = scalar_lea.vmem [#allocation7], %s516
        // Predicated region
        $region45: #{tpu_custom_call.1} parent=31 // pred_check
          %p518 = pneg %p120
        $region46: #{tpu_custom_call.1} parent=31 // pred_check_branch
          %520 = sbr.rel (%p518) target = $region48
        $region47: #{tpu_custom_call.1} parent=31 // pred_region
          %s522 = ssub.s32 16, 16
          %523 = vsyncadd %s515, %s522
          %s524 = smul.addr %s24, 16
          %s525 = scalar_lea.hbm %s3, %s524
          %s527 = sshll.u32 %s517, 4
          %s528 = int_to_ptr.vmem [resolvable:$true] %s527
          %530 = dma.vmem_to_hbm [thread:$0]  %s528, 16, %s525, %s515
        $region48: #{tpu_custom_call.1} parent=31 // pred_fallthru
          _
      $region32: #{tpu_custom_call.1} parent=5 // pred_fallthru
        _
      %p531 = scmp.le.s32.totalorder 2, %s15
      // Predicated region
      $region49: #{tpu_custom_call.1} parent=5 // pred_check
        %p532 = pneg %p531
      $region50: #{tpu_custom_call.1} parent=5 // pred_check_branch
        %534 = sbr.rel (%p532) target = $region52
      $region51: #{tpu_custom_call.1} parent=5 // pred_region
        %s535 = ssub.s32 %s15, 2
        // Predicated region
        $region53: #{tpu_custom_call.1} parent=51 // pred_check
          %p536 = pneg %p126
        $region54: #{tpu_custom_call.1} parent=51 // pred_check_branch
          %538 = sbr.rel (%p536) target = $region56
        $region55: #{tpu_custom_call.1} parent=51 // pred_region
          %s539 = sand.u32 %s111, 1
          %s540 = scalar_lea.sflag [#allocation6], %s539
          %s541 = sand.u32 %s111, 1
          %s542 = scalar_lea.vmem [#allocation7], %s541
          %543 = dma.done %s540, 16
        $region56: #{tpu_custom_call.1} parent=51 // pred_fallthru
          _
      $region52: #{tpu_custom_call.1} parent=5 // pred_fallthru
        _
    $region6: #{tpu_custom_call.1} parent=1 // loop_footer
      %s19 = sadd.s32 1, %s15
    $region7: #{tpu_custom_call.1} parent=1 // loop_footer_branch
      %14 = sbr.rel target = $region3
    $region8: #{tpu_custom_call.1} parent=1 // loop_exit
      _
    %544 = vsyncpa [#allocation5], 1
    %s545 = scalar_lea.sflag [#allocation5], 1
    %546 = vsyncpa %s545, 1
    %547 = vsyncpa [#allocation6], 1
    %s548 = scalar_lea.sflag [#allocation6], 1
    %549 = vsyncpa %s548, 1

</llo_original>
